<compile_context>
chip_gen: v7x
topology: tpu7x:2x2x1
jax: 0.10.0
libtpu: 0.0.40
codegen_flags: <defaults>
</compile_context>

<pallas_src>
import math
from functools import partial

import jax
import jax.numpy as jnp
from jax import lax
from jax.experimental import pallas as pl
from jax.experimental.pallas import tpu as pltpu
from jax.scipy.linalg import block_diag


def _round_up(a, b):
    return (a + b - 1) // b * b


# ----------------------------- Pallas kernel --------------------------------
def _pq_fused_kernel(x_ref, cb_ref, codes_ref, o_ref, lut_ref, *, cache_lut):
    """One (M-tile, N-tile) output block of  x @ W_pq.T  via the PQ-LUT trick.

    x_ref:     (tm, K)    bf16        input rows of this M tile (resident across N tiles)
    cb_ref:    (K, S*C)   bf16        block-diagonal transposed codebooks (VMEM resident)
    codes_ref: (S, tn)    int8/int32  centroid codes for this N tile
    o_ref:     (tm, tn)   f32         output tile
    lut_ref:   (tm, S*C)  bf16        VMEM scratch holding the per-M-tile LUT
    """
    S, tn = codes_ref.shape
    SC = cb_ref.shape[1]
    C = SC // S

    def compute_lut():
        # LUT = x_tile @ blockdiag(codebooks.T): one MXU matmul with contraction
        # depth K (full systolic fill for K >= 256), f32 accumulation.
        # LUT is kept bf16 for the selection matmul; keep it f32 here if the
        # tolerance vs the f32 reference ever needs to shrink.
        return jnp.dot(x_ref[...], cb_ref[...],
                       preferred_element_type=jnp.float32).astype(jnp.bfloat16)

    if cache_lut:
        # LUT depends only on the M tile -> compute once per M tile (j == 0) and
        # reuse for every N tile (the N grid axis is marked "arbitrary").
        @pl.when(pl.program_id(1) == 0)
        def _():
            lut_ref[...] = compute_lut()

        lut = lut_ref[...]
    else:
        lut = compute_lut()

    # Fused transposed one-hot selector (S*C, tn): row s*C + c is 1 where
    # codes[s, n] == c.  Built with one iota compare (bool -> bf16 directly),
    # no gather, no f32 intermediate.
    codes = codes_ref[...].astype(jnp.int32)                          # (S, tn)
    iota_c = lax.broadcasted_iota(jnp.int32, (S, C, tn), 1)           # (S, C, tn)
    onehot = (iota_c == codes[:, None, :]).astype(jnp.bfloat16)
    onehot = onehot.reshape(SC, tn)

    # Single selection matmul per grid step (contraction depth S*C), f32 accum,
    # written straight to the lane-dense output tile.
    o_ref[...] = jnp.dot(lut, onehot, preferred_element_type=jnp.float32)


# ------------------------------ host wrapper ---------------------------------
def _pick_tm(M, K):
    if M < 128:
        return _round_up(M, 16)          # bf16 sublane-packing friendly
    # Largest of {512, 256, 128} that fits M and keeps the (tm, K) bf16 input
    # block (double-buffered) to a few MiB of VMEM.
    for tm in (512, 256, 128):
        if M >= tm and tm * K * 2 <= 8 * 1024 * 1024:
            return tm
    return 128


@jax.jit
def pq_linear_forward(x, cb_blockdiag, codesT):
    """x: (..., K); cb_blockdiag: (K, S*C) bf16; codesT: (S, N) int8/int32 -> (..., N) f32."""
    K, SC = cb_blockdiag.shape
    S, N = codesT.shape

    lead = x.shape[:-1]
    M = math.prod(lead) if lead else 1
    x2 = x.reshape(M, K).astype(jnp.bfloat16)       # natural (M, K) layout, lane-dense

    # ---- tile sizes & padding: sublane-aligned M tile, lane-dense N tile ----
    tm = _pick_tm(M, K)
    M_pad = _round_up(M, tm)
    N_pad = _round_up(N, 128)
    tn = 256 if N_pad % 256 == 0 else 128           # v5e-friendly store width

    if M_pad != M:
        x2 = jnp.pad(x2, ((0, M_pad - M), (0, 0)))
    if N_pad != N:
        # Padded codes are centroid 0: those output columns hold real centroid-0
        # sums but are sliced off below and never reused/aliased.
        codesT = jnp.pad(codesT, ((0, 0), (0, N_pad - N)))

    grid = (M_pad // tm, N_pad // tn)
    # Cache the LUT across N tiles only when there are several M tiles (keeps the
    # "parallel" M axis feeding both v7x TensorCores).  With a single M tile keep
    # both axes "parallel" and recompute the (cheap) LUT per N tile instead.
    cache_lut = grid[0] > 1 and grid[1] > 1

    out = pl.pallas_call(
        partial(_pq_fused_kernel, cache_lut=cache_lut),
        out_shape=jax.ShapeDtypeStruct((M_pad, N_pad), jnp.float32),
        grid_spec=pltpu.PrefetchScalarGridSpec(
            num_scalar_prefetch=0,
            grid=grid,
            in_specs=[
                pl.BlockSpec((tm, K), lambda i, j: (i, 0)),   # x tile (resident across j)
                pl.BlockSpec((K, SC), lambda i, j: (0, 0)),   # block-diag codebooks (resident)
                pl.BlockSpec((S, tn), lambda i, j: (0, j)),   # int8 codes for this N tile
            ],
            out_specs=pl.BlockSpec((tm, tn), lambda i, j: (i, j)),
            scratch_shapes=[pltpu.VMEM((tm, SC), jnp.bfloat16)],
        ),
        compiler_params=pltpu.CompilerParams(
            dimension_semantics=("parallel", "arbitrary") if cache_lut
            else ("parallel", "parallel"),
            vmem_limit_bytes=48 * 1024 * 1024,       # < 64 MiB physical on v7x
        ),
    )(x2, cb_blockdiag, codesT)

    return out[:M, :N].reshape(lead + (N,))


# ------------------------------ PQLinear module -------------------------------
class PQLinear:
    """JAX port of the PyTorch PQLinear module (forward pass only)."""

    def __init__(self, in_features, out_features, num_subvectors, num_centroids, key):
        assert in_features % num_subvectors == 0
        self.in_features = in_features
        self.out_features = out_features
        self.num_subvectors = num_subvectors
        self.num_centroids = num_centroids
        self.subvector_dim = in_features // num_subvectors

        k_cb, k_asg = jax.random.split(key)
        # Stacked codebooks: (S, C, D)  (== ParameterList of (C, D) tables).
        self.codebooks = jax.random.normal(
            k_cb, (num_subvectors, num_centroids, self.subvector_dim),
            dtype=jnp.float32)
        # Centroid indices: (out_features, S).
        self.assignments = jax.random.randint(
            k_asg, (out_features, num_subvectors), 0, num_centroids,
            dtype=jnp.int32)

        # ---- kernel-side parameters, prepared once at init (no per-call prep) ----
        # Block-diagonal transposed codebooks (K, S*C): one K-deep LUT matmul
        # replaces S shallow D-deep matmuls.
        self.cb_blockdiag = block_diag(
            *[self.codebooks[s].T for s in range(num_subvectors)]
        ).astype(jnp.bfloat16)
        # Codes transposed to (S, N), stored as int8 when C <= 128 so the streamed
        # "weight" keeps the PQ-compressed footprint (4x less DMA than int32).
        code_dtype = jnp.int8 if num_centroids <= 128 else jnp.int32
        self.codesT = self.assignments.T.astype(code_dtype)

    def dequantize_weight(self):
        # Reference-only dense reconstruction (NOT used by the kernel path).
        parts = [self.codebooks[s][self.assignments[:, s]]
                 for s in range(self.num_subvectors)]
        return jnp.concatenate(parts, axis=1)        # (out_features, in_features)

    def __call__(self, x):
        return pq_linear_forward(x, self.cb_blockdiag, self.codesT)


# --------------------------------- main ---------------------------------------
def _check(name, out, ref):
    max_err = float(jnp.max(jnp.abs(out - ref)))
    rel_err = float(jnp.linalg.norm(out - ref) / jnp.linalg.norm(ref))
    # Kernel feeds the MXU bf16 operands (f32 accumulation) -> bf16-level tolerance.
    tol_abs = max(0.75, 0.02 * float(jnp.max(jnp.abs(ref))))
    assert max_err < tol_abs and rel_err < 2e-2, (name, max_err, rel_err)


if __name__ == "__main__":
    key = jax.random.PRNGKey(0)

    # --- test 1: small decode-like shape (single M tile -> non-cached LUT path) ---
    k_param, k_x, key = jax.random.split(key, 3)
    layer = PQLinear(in_features=256, out_features=128,
                     num_subvectors=4, num_centroids=16, key=k_param)
    x = jax.random.normal(k_x, (2, 8, 256), dtype=jnp.float32)
    out = jax.block_until_ready(layer(x))
    assert out.shape == (2, 8, 128)
    ref = jnp.matmul(x, layer.dequantize_weight().T,
                     precision=lax.Precision.HIGHEST)
    _check("small", out, ref)

    # --- test 2: larger shape (multiple M/N tiles -> cached-LUT path + N padding) ---
    k_param2, k_x2, key = jax.random.split(key, 3)
    layer2 = PQLinear(in_features=256, out_features=400,
                      num_subvectors=8, num_centroids=32, key=k_param2)
    x2 = jax.random.normal(k_x2, (8, 128, 256), dtype=jnp.float32)
    out2 = jax.block_until_ready(layer2(x2))
    assert out2.shape == (8, 128, 400)
    ref2 = jnp.matmul(x2, layer2.dequantize_weight().T,
                      precision=lax.Precision.HIGHEST)
    _check("large", out2, ref2)

    print("KERNEL_OK")
</pallas_src>

<mosaic_0001>
module attributes {stable_mosaic.version = 11 : i64} {
  func.func @_pq_fused_kernel(%arg0: i32, %arg1: i32, %arg2: memref<16x256xbf16, #tpu.memory_space<vmem>>, %arg3: memref<256x64xbf16, #tpu.memory_space<vmem>>, %arg4: memref<4x128xi8, #tpu.memory_space<vmem>>, %arg5: memref<16x128xf32, #tpu.memory_space<vmem>>, %arg6: memref<16x64xbf16, #tpu.memory_space<vmem>>) attributes {dimension_semantics = [#tpu.dimension_semantics<parallel>, #tpu.dimension_semantics<parallel>], iteration_bounds = array<i64: 1, 1>, scalar_prefetch = 0 : i64, scratch_operands = 1 : i64, tpu.core_type = #tpu.core_type<tc>, window_params = [{transform_indices = @transform_0, window_bounds = array<i64: 16, 256>}, {pipeline_mode = #tpu.pipeline_mode<synchronous>, transform_indices = @transform_1, window_bounds = array<i64: 256, 64>}, {transform_indices = @transform_2, window_bounds = array<i64: 4, 128>}, {transform_indices = @transform_3, window_bounds = array<i64: 16, 128>}]} {
    %c0 = arith.constant 0 : index
    %c0_0 = arith.constant 0 : index
    %0 = vector.load %arg2[%c0, %c0_0] : memref<16x256xbf16, #tpu.memory_space<vmem>>, vector<16x256xbf16>
    %c0_1 = arith.constant 0 : index
    %c0_2 = arith.constant 0 : index
    %1 = vector.load %arg3[%c0_1, %c0_2] : memref<256x64xbf16, #tpu.memory_space<vmem>>, vector<256x64xbf16>
    %cst = arith.constant dense<0.000000e+00> : vector<16x64xf32>
    %2 = tpu.matmul %0, %1, %cst {dimension_numbers = #tpu.dot_dimension_numbers<[1], [0], [0], [1], [0, 0, 1, 1], [], []>} : vector<16x256xbf16>, vector<256x64xbf16>, vector<16x64xf32> -> vector<16x64xf32>
    %3 = arith.truncf %2 : vector<16x64xf32> to vector<16x64xbf16>
    %c0_3 = arith.constant 0 : index
    %c0_4 = arith.constant 0 : index
    %4 = vector.load %arg4[%c0_3, %c0_4] : memref<4x128xi8, #tpu.memory_space<vmem>>, vector<4x128xi8>
    %5 = arith.extsi %4 : vector<4x128xi8> to vector<4x128xi32>
    %6 = tpu.iota {dimensions = array<i32: 1>} : vector<4x16x128xi32>
    %7 = vector.shape_cast %5 : vector<4x128xi32> to vector<4x1x128xi32>
    %8 = vector.broadcast %7 : vector<4x1x128xi32> to vector<4x16x128xi32>
    %9 = arith.cmpi eq, %6, %8 : vector<4x16x128xi32>
    %10 = arith.extui %9 : vector<4x16x128xi1> to vector<4x16x128xi32>
    %11 = arith.sitofp %10 : vector<4x16x128xi32> to vector<4x16x128xf32>
    %12 = arith.truncf %11 : vector<4x16x128xf32> to vector<4x16x128xbf16>
    %13 = vector.shape_cast %12 : vector<4x16x128xbf16> to vector<64x128xbf16>
    %cst_5 = arith.constant dense<0.000000e+00> : vector<16x128xf32>
    %14 = tpu.matmul %3, %13, %cst_5 {dimension_numbers = #tpu.dot_dimension_numbers<[1], [0], [0], [1], [0, 0, 1, 1], [], []>} : vector<16x64xbf16>, vector<64x128xbf16>, vector<16x128xf32> -> vector<16x128xf32>
    %c0_6 = arith.constant 0 : index
    %c0_7 = arith.constant 0 : index
    %15 = vector.load %arg5[%c0_6, %c0_7] : memref<16x128xf32, #tpu.memory_space<vmem>>, vector<16x128xf32>
    tpu.vector_store %arg5[%c0_6, %c0_7], %14 {strides = array<i32>} : memref<16x128xf32, #tpu.memory_space<vmem>>, vector<16x128xf32>,
    return
  }
  func.func @transform_0(%arg0: i32, %arg1: i32) -> (i32, i32) {
    %c0_i32 = arith.constant 0 : i32
    %c0_i32_0 = arith.constant 0 : i32
    return %arg0, %c0_i32 : i32, i32
  }
  func.func @transform_1(%arg0: i32, %arg1: i32) -> (i32, i32) {
    %c0_i32 = arith.constant 0 : i32
    %c0_i32_0 = arith.constant 0 : i32
    %c0_i32_1 = arith.constant 0 : i32
    return %c0_i32, %c0_i32_0 : i32, i32
  }
  func.func @transform_2(%arg0: i32, %arg1: i32) -> (i32, i32) {
    %c0_i32 = arith.constant 0 : i32
    %c0_i32_0 = arith.constant 0 : i32
    return %c0_i32, %arg1 : i32, i32
  }
  func.func @transform_3(%arg0: i32, %arg1: i32) -> (i32, i32) {
    %c0_i32 = arith.constant 0 : i32
    return %arg0, %arg1 : i32, i32
  }
}

</mosaic_0001>

<llo_original>
// kernel: pq_linear_forward.1
$region0: #{pq_linear_forward.1}
  #allocation0 [shape = 'u32[]', space=smem, size = 0x4, offset = 0x4, fixed_abs, tag = 'smem constant byte address 0x4 - core index']
  #allocation1 [shape = 'u32[144,128]{1,0:T(1,128)}', space=vmem, size = 0x12000, scoped, tag = 'internal scratch']
  #allocation2 [shape = 'bf16[16,64]{1,0:T(16,128)(2,1)}', space=vmem, size = 0x1000, scoped, tag = 'scratch operand']
  %s0 = inlined_call_operand.vmem [shape: bf16[16,256], index: 0, kind: input, shape index: {}]
  %s1 = inlined_call_operand.vmem [shape: bf16[256,64], index: 1, kind: input, shape index: {}]
  %s2 = inlined_call_operand.vmem [shape: s8[4,128], index: 2, kind: input, shape index: {}]
  %s3 = inlined_call_operand.hbm [shape: f32[16,128], index: 3, kind: output, shape index: {}]
  %s4 = sld [smem:[#allocation0]]
  $region22: #{pq_linear_forward.1} parent=0
    _
  %s6 = ssub.s32 1, %s4
  %s7 = scalar_select 0, %s6, %s4
  $region1: #{pq_linear_forward.1} parent=0
    #allocation3 [shape = 'u8[8192]{0}', space=vmem, size = 0x2000, scoped, tag = 'output window, operand 0, single buffered']
    #allocation4 [shape = 's32[1]{0}', space=sflag, size = 0x4, scoped, tag = 'scoped memory for pq_linear_forward.1']
    %8 = vsyncpa [#allocation4], 0
    // Predicated region
    $region2: #{pq_linear_forward.1} parent=1 // pred_check
      _
    $region3: #{pq_linear_forward.1} parent=1 // pred_check_branch
      %10 = sbr.rel (0) target = $region5
    $region4: #{pq_linear_forward.1} parent=1 // pred_region
      _
    $region5: #{pq_linear_forward.1} parent=1 // pred_fallthru
      _
    // Predicated region
    $region6: #{pq_linear_forward.1} parent=1 // pred_check
      _
    $region7: #{pq_linear_forward.1} parent=1 // pred_check_branch
      %12 = sbr.rel (0) target = $region9
    $region8: #{pq_linear_forward.1} parent=1 // pred_region
      _
    $region9: #{pq_linear_forward.1} parent=1 // pred_fallthru
      _
    // Predicated region
    $region10: #{pq_linear_forward.1} parent=1 // pred_check
      _
    $region11: #{pq_linear_forward.1} parent=1 // pred_check_branch
      %14 = sbr.rel (0) target = $region13
    $region12: #{pq_linear_forward.1} parent=1 // pred_region
      _
    $region13: #{pq_linear_forward.1} parent=1 // pred_fallthru
      _
    %v16 = vld [vmem:[%s0] sm:$0xff]
    %v17 = vld [vmem:[%s0 + $0x8] sm:$0xff]
    %v18 = vld [vmem:[%s1] sm:$0xf]
    %v19 = vld [vmem:[%s1 + $0x4] sm:$0xf]
    %v20 = vld [vmem:[%s1 + $0x8] sm:$0xf]
    %v21 = vld [vmem:[%s1 + $0xc] sm:$0xf]
    %v22 = vld [vmem:[%s1 + $0x10] sm:$0xf]
    %v23 = vld [vmem:[%s1 + $0x14] sm:$0xf]
    %v24 = vld [vmem:[%s1 + $0x18] sm:$0xf]
    %v25 = vld [vmem:[%s1 + $0x1c] sm:$0xf]
    %v26 = vld [vmem:[%s1 + $0x20] sm:$0xf]
    %v27 = vld [vmem:[%s1 + $0x24] sm:$0xf]
    %v28 = vld [vmem:[%s1 + $0x28] sm:$0xf]
    %v29 = vld [vmem:[%s1 + $0x2c] sm:$0xf]
    %v30 = vld [vmem:[%s1 + $0x30] sm:$0xf]
    %v31 = vld [vmem:[%s1 + $0x34] sm:$0xf]
    %v32 = vld [vmem:[%s1 + $0x38] sm:$0xf]
    %v33 = vld [vmem:[%s1 + $0x3c] sm:$0xf]
    %v34 = vld [vmem:[%s1 + $0x40] sm:$0xf]
    %v35 = vld [vmem:[%s1 + $0x44] sm:$0xf]
    %v36 = vld [vmem:[%s1 + $0x48] sm:$0xf]
    %v37 = vld [vmem:[%s1 + $0x4c] sm:$0xf]
    %v38 = vld [vmem:[%s1 + $0x50] sm:$0xf]
    %v39 = vld [vmem:[%s1 + $0x54] sm:$0xf]
    %v40 = vld [vmem:[%s1 + $0x58] sm:$0xf]
    %v41 = vld [vmem:[%s1 + $0x5c] sm:$0xf]
    %v42 = vld [vmem:[%s1 + $0x60] sm:$0xf]
    %v43 = vld [vmem:[%s1 + $0x64] sm:$0xf]
    %v44 = vld [vmem:[%s1 + $0x68] sm:$0xf]
    %v45 = vld [vmem:[%s1 + $0x6c] sm:$0xf]
    %v46 = vld [vmem:[%s1 + $0x70] sm:$0xf]
    %v47 = vld [vmem:[%s1 + $0x74] sm:$0xf]
    %v48 = vld [vmem:[%s1 + $0x78] sm:$0xf]
    %v49 = vld [vmem:[%s1 + $0x7c] sm:$0xf]
    %v52 = vunpack.c.l.b16 %v16
    %v53 = vunpack.c.h.b16 %v16
    %v54 = vunpack.c.l.b16 %v17
    %v55 = vunpack.c.h.b16 %v17
    %v56 = vpack.c.b16 %v54, %v52
    %v57 = vpack.c.b16 %v55, %v53
    %v92 = vunpack.c.l.b16 %v18
    %v93 = vunpack.c.l.b16 %v19
    %v94 = vunpack.c.l.b16 %v20
    %v95 = vunpack.c.l.b16 %v21
    %v96 = vunpack.c.l.b16 %v22
    %v97 = vunpack.c.l.b16 %v23
    %v98 = vunpack.c.l.b16 %v24
    %v99 = vunpack.c.l.b16 %v25
    %v100 = vunpack.c.l.b16 %v26
    %v101 = vunpack.c.l.b16 %v27
    %v102 = vunpack.c.l.b16 %v28
    %v103 = vunpack.c.l.b16 %v29
    %v104 = vunpack.c.l.b16 %v30
    %v105 = vunpack.c.l.b16 %v31
    %v106 = vunpack.c.l.b16 %v32
    %v107 = vunpack.c.l.b16 %v33
    %v108 = vunpack.c.l.b16 %v34
    %v109 = vunpack.c.l.b16 %v35
    %v110 = vunpack.c.l.b16 %v36
    %v111 = vunpack.c.l.b16 %v37
    %v112 = vunpack.c.l.b16 %v38
    %v113 = vunpack.c.l.b16 %v39
    %v114 = vunpack.c.l.b16 %v40
    %v115 = vunpack.c.l.b16 %v41
    %v116 = vunpack.c.l.b16 %v42
    %v117 = vunpack.c.l.b16 %v43
    %v118 = vunpack.c.l.b16 %v44
    %v119 = vunpack.c.l.b16 %v45
    %v120 = vunpack.c.l.b16 %v46
    %v121 = vunpack.c.l.b16 %v47
    %v122 = vunpack.c.l.b16 %v48
    %v123 = vunpack.c.l.b16 %v49
    %v124 = vpack.c.b16 %v93, %v92
    %v125 = vpack.c.b16 %v95, %v94
    %v126 = vpack.c.b16 %v97, %v96
    %v127 = vpack.c.b16 %v99, %v98
    %v128 = vpack.c.b16 %v101, %v100
    %v129 = vpack.c.b16 %v103, %v102
    %v130 = vpack.c.b16 %v105, %v104
    %v131 = vpack.c.b16 %v107, %v106
    %v132 = vpack.c.b16 %v109, %v108
    %v133 = vpack.c.b16 %v111, %v110
    %v134 = vpack.c.b16 %v113, %v112
    %v135 = vpack.c.b16 %v115, %v114
    %v136 = vpack.c.b16 %v117, %v116
    %v137 = vpack.c.b16 %v119, %v118
    %v138 = vpack.c.b16 %v121, %v120
    %v139 = vpack.c.b16 %v123, %v122
    %156 = vmatprep.subr.bf16.mxu0 0
    %157 = vmatpush1.bf16.msra.mxu0 %v124
    %158 = vmatprep.subr.bf16.mxu0 0
    %159 = vmatpush1.bf16.msra.mxu0 %v125
    %160 = vmatprep.subr.bf16.mxu0 0
    %161 = vmatpush1.bf16.msra.mxu0 %v126
    %162 = vmatprep.subr.bf16.mxu0 0
    %163 = vmatpush1.bf16.msra.mxu0 %v127
    %164 = vmatprep.subr.bf16.mxu0 0
    %165 = vmatpush1.bf16.msra.mxu0 %v128
    %166 = vmatprep.subr.bf16.mxu0 0
    %167 = vmatpush1.bf16.msra.mxu0 %v129
    %168 = vmatprep.subr.bf16.mxu0 0
    %169 = vmatpush1.bf16.msra.mxu0 %v130
    %170 = vmatprep.subr.bf16.mxu0 0
    %171 = vmatpush1.bf16.msra.mxu0 %v131
    %172 = vmatprep.subr.bf16.mxu0 0
    %173 = vmatpush1.bf16.msra.mxu0 %v132
    %174 = vmatprep.subr.bf16.mxu0 0
    %175 = vmatpush1.bf16.msra.mxu0 %v133
    %176 = vmatprep.subr.bf16.mxu0 0
    %177 = vmatpush1.bf16.msra.mxu0 %v134
    %178 = vmatprep.subr.bf16.mxu0 0
    %179 = vmatpush1.bf16.msra.mxu0 %v135
    %180 = vmatprep.subr.bf16.mxu0 0
    %181 = vmatpush1.bf16.msra.mxu0 %v136
    %182 = vmatprep.subr.bf16.mxu0 0
    %183 = vmatpush1.bf16.msra.mxu0 %v137
    %184 = vmatprep.subr.bf16.mxu0 0
    %185 = vmatpush1.bf16.msra.mxu0 %v138
    %186 = vmatprep.subr.bf16.mxu0 0
    %187 = vmatpush1.bf16.msra.mxu0 %v139
    %188 = vmatprep.mubr.bf16.mxu0 %v57
    %189 = vmatmul.mubr.bf16.gmra.mrb[0].mxu0 %v56
    %v190 = vpop.f32.mrb[0].mxu0
    %v191 = vadd.f32 0.0, %v190
    %v192 = vpop.f32.mrb[0].mxu0
    %v193 = vpop.f32.mrb[0].mxu0
    %v194 = vadd.f32 0.0, %v193
    %v195 = vpop.f32.mrb[0].mxu0
    %196 = vdwg.mxu0
    %v197 = vpack.c.bf16 %v194, %v191
    %v198 = vld [vmem:[%s2] sm:$0x1]
    %v199 = vunpack.c.0.s8 %v198
    %v200 = vlaneseq
    %v201 = vshrl.u32 %v200, 7
    %v202 = vadd.s32 %v201, 8
    %v204 = vunpack.c.l.s4 1966171168
    %v205 = vunpack.c.0.s8 %v204
    %v206 = vlaneseq
    %v207 = vshrl.u32 %v206, 7
    %v208 = vsub.s32 %v205, %v207
    %v209 = vrot.slane %v199, %v208
    %v210 = vcombine.high %v209, %v209
    %v212 = vunpack.c.l.s4 1966171168
    %v213 = vunpack.c.0.s8 %v212
    %v214 = vlaneseq
    %v215 = vshrl.u32 %v214, 7
    %v216 = vsub.s32 %v213, %v215
    %v217 = vrot.slane %v209, %v216
    %v219 = vunpack.c.l.s4 1966171168
    %v220 = vunpack.c.0.s8 %v219
    %v221 = vlaneseq
    %v222 = vshrl.u32 %v221, 7
    %v223 = vsub.s32 %v220, %v222
    %v224 = vrot.slane %v210, %v223
    %v225 = vcombine.high %v217, %v217
    %v226 = vcombine.high %v224, %v224
    %v227 = vlaneseq
    %v228 = vshrl.u32 %v227, 7
    %v229 = vsub.s32 0, %v228
    %v230 = vrot.slane %v217, %v229
    %v231 = vlaneseq
    %v232 = vshrl.u32 %v231, 7
    %v233 = vsub.s32 0, %v232
    %v234 = vrot.slane %v224, %v233
    %v235 = vlaneseq
    %v236 = vshrl.u32 %v235, 7
    %v237 = vsub.s32 0, %v236
    %v238 = vrot.slane %v225, %v237
    %v239 = vlaneseq
    %v240 = vshrl.u32 %v239, 7
    %v241 = vsub.s32 0, %v240
    %v242 = vrot.slane %v226, %v241
    %vm243 = vcmp.eq.s32.totalorder %v201, %v230
    %vm244 = vcmp.eq.s32.totalorder %v202, %v230
    %vm245 = vcmp.eq.s32.totalorder %v201, %v234
    %vm246 = vcmp.eq.s32.totalorder %v202, %v234
    %vm247 = vcmp.eq.s32.totalorder %v201, %v238
    %vm248 = vcmp.eq.s32.totalorder %v202, %v238
    %vm249 = vcmp.eq.s32.totalorder %v201, %v242
    %vm250 = vcmp.eq.s32.totalorder %v202, %v242
    %v251 = vsel %vm243, 1, 0
    %v252 = vsel %vm244, 1, 0
    %v253 = vsel %vm245, 1, 0
    %v254 = vsel %vm246, 1, 0
    %v255 = vsel %vm247, 1, 0
    %v256 = vsel %vm248, 1, 0
    %v257 = vsel %vm249, 1, 0
    %v258 = vsel %vm250, 1, 0
    %v259 = vcvt.s32.f32 %v251
    %v260 = vcvt.s32.f32 %v252
    %v261 = vcvt.s32.f32 %v253
    %v262 = vcvt.s32.f32 %v254
    %v263 = vcvt.s32.f32 %v255
    %v264 = vcvt.s32.f32 %v256
    %v265 = vcvt.s32.f32 %v257
    %v266 = vcvt.s32.f32 %v258
    %v267 = vpack.c.bf16 %v260, %v259
    %v268 = vpack.c.bf16 %v262, %v261
    %v269 = vpack.c.bf16 %v264, %v263
    %v270 = vpack.c.bf16 %v266, %v265
    %vm271 = vcmask 523264
    %v273 = vsel %vm271, %v197, 0
    %275 = vmatprep.subr.bf16.mxu0 0
    %276 = vmatpush1.bf16.msra.mxu0 %v267
    %277 = vmatprep.subr.bf16.mxu0 0
    %278 = vmatpush1.bf16.msra.mxu0 %v268
    %279 = vmatprep.subr.bf16.mxu0 0
    %280 = vmatpush1.bf16.msra.mxu0 %v269
    %281 = vmatprep.subr.bf16.mxu0 0
    %282 = vmatpush1.bf16.msra.mxu0 %v270
    %283 = vmatprep.subr.bf16.mxu0 0
    %284 = vmatpush1.bf16.msra.mxu0 0
    %285 = vmatprep.subr.bf16.mxu0 0
    %286 = vmatpush1.bf16.msra.mxu0 0
    %287 = vmatprep.subr.bf16.mxu0 0
    %288 = vmatpush1.bf16.msra.mxu0 0
    %289 = vmatprep.subr.bf16.mxu0 0
    %290 = vmatpush1.bf16.msra.mxu0 0
    %291 = vmatprep.subr.bf16.mxu0 0
    %292 = vmatpush1.bf16.msra.mxu0 0
    %293 = vmatprep.subr.bf16.mxu0 0
    %294 = vmatpush1.bf16.msra.mxu0 0
    %295 = vmatprep.subr.bf16.mxu0 0
    %296 = vmatpush1.bf16.msra.mxu0 0
    %297 = vmatprep.subr.bf16.mxu0 0
    %298 = vmatpush1.bf16.msra.mxu0 0
    %299 = vmatprep.subr.bf16.mxu0 0
    %300 = vmatpush1.bf16.msra.mxu0 0
    %301 = vmatprep.subr.bf16.mxu0 0
    %302 = vmatpush1.bf16.msra.mxu0 0
    %303 = vmatprep.subr.bf16.mxu0 0
    %304 = vmatpush1.bf16.msra.mxu0 0
    %305 = vmatprep.subr.bf16.mxu0 0
    %306 = vmatpush1.bf16.msra.mxu0 0
    %307 = vmatprep.mubr.bf16.mxu0 0
    %308 = vmatmul.mubr.bf16.gmra.mrb[0].mxu0 %v273
    %v309 = vpop.f32.mrb[0].mxu0
    %v310 = vadd.f32 0.0, %v309
    %v311 = vpop.f32.mrb[0].mxu0
    %v312 = vpop.f32.mrb[0].mxu0
    %v313 = vadd.f32 0.0, %v312
    %v314 = vpop.f32.mrb[0].mxu0
    %315 = vdwg.mxu0
    %316 = vst [vmem:[#allocation3] sm:$0xff] %v310
    %317 = vst [vmem:[#allocation3 + $0x8] sm:$0xff] %v313
    // Predicated region
    $region14: #{pq_linear_forward.1} parent=1 // pred_check
      _
    $region15: #{pq_linear_forward.1} parent=1 // pred_check_branch
      %319 = sbr.rel (0) target = $region17
    $region16: #{pq_linear_forward.1} parent=1 // pred_region
      %s321 = ssub.s32 256, 256
      %322 = vsyncadd [#allocation4], %s321
      %s323 = sshll.u32 [#allocation3], 4
      %s324 = int_to_ptr.vmem [resolvable:$true] %s323
      %329 = dma.vmem_to_hbm [thread:$0]  %s324, 256, %s3, [#allocation4], 128, 128, 8
    $region17: #{pq_linear_forward.1} parent=1 // pred_fallthru
      _
    // Predicated region
    $region18: #{pq_linear_forward.1} parent=1 // pred_check
      _
    $region19: #{pq_linear_forward.1} parent=1 // pred_check_branch
      %331 = sbr.rel (0) target = $region21
    $region20: #{pq_linear_forward.1} parent=1 // pred_region
      %332 = dma.done [#allocation4], 256
    $region21: #{pq_linear_forward.1} parent=1 // pred_fallthru
      _
    %333 = vsyncpa [#allocation4], 1

</llo_original>
